<compile_context>
chip_gen: v5e
topology: v5e:2x2
jax: 0.10.0
libtpu: 0.0.40
codegen_flags: <defaults>
</compile_context>

<pallas_src>
import math
import functools

import jax
import jax.numpy as jnp
from jax import lax
from jax.experimental import pallas as pl
from jax.experimental.pallas import tpu as pltpu


def _bert_attn_kernel(x_ref, wqkv_ref, bqkv_ref, mask_ref, o_ref, qkv_ref, *,
                      num_heads, head_size, hidden, q_tile, exp_dtype):
    qi = pl.program_id(1)
    x = x_ref[0]                          # [S, H]  compute dtype
    mask = mask_ref[0]                    # [1, S]  f32 additive mask
    compute_dtype = x.dtype

    # Fused Q/K/V projection, once per batch element (first query tile).
    # Wqkv already has 1/sqrt(d) folded into its Q columns.
    @pl.when(qi == 0)
    def _():
        qkv = jnp.dot(x, wqkv_ref[...], preferred_element_type=jnp.float32)
        qkv_ref[...] = (qkv + bqkv_ref[...]).astype(compute_dtype)

    q0 = pl.multiple_of(qi * q_tile, q_tile)

    # TODO(synk): for very long sequences switch to a KV-tiled online-softmax
    # (flash-style) inner loop instead of materializing [TQ, S] scores.
    # TODO(synk): with head_size=64, 64-lane per-head slices cross the (8,128)
    # vreg tile; processing heads in pairs would make slices 128-lane aligned.
    for h in range(num_heads):
        lo = h * head_size
        q_h = qkv_ref[pl.ds(q0, q_tile), pl.ds(lo, head_size)]            # [TQ,d]
        k_h = qkv_ref[:, pl.ds(hidden + lo, head_size)]                   # [S, d]
        v_h = qkv_ref[:, pl.ds(2 * hidden + lo, head_size)]               # [S, d]

        # scores = (q / sqrt(d)) @ k^T, contracting on d (no transpose copy).
        scores = lax.dot_general(q_h, k_h, (((1,), (1,)), ((), ())),
                                 preferred_element_type=jnp.float32)      # [TQ,S]
        scores = scores + mask

        # Numerically stable softmax; max / denom stats stay in f32.
        m = jnp.max(scores, axis=-1, keepdims=True)
        e = jnp.exp((scores - m).astype(exp_dtype))
        denom = jnp.sum(e.astype(jnp.float32), axis=-1, keepdims=True)    # [TQ,1]

        # TODO(synk): attention-probs dropout omitted (inference path).
        ctx = jnp.dot(e.astype(compute_dtype), v_h,
                      preferred_element_type=jnp.float32)                 # [TQ,d]
        ctx = ctx * pl.reciprocal(denom, approx=True)                     # EUP
        o_ref[0, :, lo:lo + head_size] = ctx.astype(o_ref.dtype)


def prepare_bert_attention_params(params, num_heads,
                                  compute_dtype=jnp.bfloat16):
    """One-time parameter prep (call once, reuse across forward calls)."""
    H = params["wq"].shape[0]
    head_size = H // num_heads
    scale = 1.0 / math.sqrt(head_size)
    # nn.Linear stores W as [out, in]; pre-transpose so the kernel does x @ W.
    # Fold the 1/sqrt(d) score scale into the Q projection.
    wqkv = jnp.concatenate(
        [params["wq"].T * scale, params["wk"].T, params["wv"].T], axis=1)
    bqkv = jnp.concatenate(
        [params["bq"] * scale, params["bk"], params["bv"]]).reshape(1, 3 * H)
    return wqkv.astype(compute_dtype), bqkv.astype(jnp.float32)


def bert_self_attention(hidden_states, attention_mask, wqkv, bqkv, num_heads,
                        *, q_tile=None, out_dtype=None, bf16_exp=False):
    """hidden_states: [S, B, H]; attention_mask: additive [B, 1, 1, S].

    wqkv / bqkv come from prepare_bert_attention_params. Returns [S, B, H].
    bf16_exp=True uses the bf16 EUP exp path (v6e/v7x); keep False on v5e.
    """
    S, B, H = hidden_states.shape
    assert H % num_heads == 0
    head_size = H // num_heads
    compute_dtype = wqkv.dtype
    out_dtype = compute_dtype if out_dtype is None else out_dtype

    if q_tile is None:
        q_tile = S
    if S % q_tile != 0 or (q_tile != S and q_tile % 8 != 0):
        raise ValueError("q_tile must divide S and be a multiple of 8")
    n_q_tiles = S // q_tile

    # Cast before transposing so the transpose moves compute-dtype bytes.
    x_bsh = jnp.transpose(hidden_states.astype(compute_dtype), (1, 0, 2))
    mask = attention_mask.reshape(B, 1, S).astype(jnp.float32)

    kernel = functools.partial(
        _bert_attn_kernel, num_heads=num_heads, head_size=head_size,
        hidden=H, q_tile=q_tile,
        exp_dtype=jnp.bfloat16 if bf16_exp else jnp.float32)

    # VMEM accounting from the actual shapes (capped at 64 MiB -> v7x-safe).
    csz = jnp.dtype(compute_dtype).itemsize
    osz = jnp.dtype(out_dtype).itemsize
    est = (H * 3 * H * csz                 # resident Wqkv (single-buffered)
           + 3 * H * 4                     # resident bias
           + 2 * S * H * csz               # double-buffered activation block
           + 2 * S * 4                     # double-buffered mask block
           + 2 * q_tile * H * osz          # double-buffered output block
           + S * 3 * H * csz               # resident qkv scratch
           + 6 * q_tile * S * 4)           # per-head score/exp temporaries
    vmem_limit = int(min(max(2 * est, 32 * 1024 * 1024), 64 * 1024 * 1024))

    out = pl.pallas_call(
        kernel,
        out_shape=jax.ShapeDtypeStruct((B, S, H), out_dtype),
        grid=(B, n_q_tiles),
        in_specs=[
            # activations: one batch row, constant across the q-tile axis
            pl.BlockSpec((1, S, H), lambda b, q: (b, 0, 0)),
            # fused weights / bias: constant index -> fetched once, resident,
            # single-buffered (double-buffering a constant block wastes VMEM)
            pl.BlockSpec((H, 3 * H), lambda b, q: (0, 0),
                         pipeline_mode=pl.Buffered(1)),
            pl.BlockSpec((1, 3 * H), lambda b, q: (0, 0),
                         pipeline_mode=pl.Buffered(1)),
            # additive attention mask for this batch
            pl.BlockSpec((1, 1, S), lambda b, q: (b, 0, 0)),
        ],
        out_specs=pl.BlockSpec((1, q_tile, H), lambda b, q: (b, q, 0)),
        scratch_shapes=[pltpu.VMEM((S, 3 * H), compute_dtype)],
        compiler_params=pltpu.CompilerParams(
            # batch axis independent (megacore-shardable); q-tile axis carries
            # the resident qkv scratch -> arbitrary.
            dimension_semantics=("parallel", "arbitrary"),
            vmem_limit_bytes=vmem_limit),
    )(x_bsh, wqkv, bqkv, mask)

    # [B, S, H] -> [S, B, H] to match the PyTorch module's output convention.
    return jnp.transpose(out, (1, 0, 2))


def _reference(hidden_states, attention_mask, params, num_heads):
    """Pure-JAX reference mirroring the PyTorch forward (f32)."""
    S, B, H = hidden_states.shape
    d = H // num_heads
    x = hidden_states.reshape(S * B, H)
    q = (x @ params["wq"].T + params["bq"]).reshape(S, B * num_heads, d)
    k = (x @ params["wk"].T + params["bk"]).reshape(S, B * num_heads, d)
    v = (x @ params["wv"].T + params["bv"]).reshape(S, B * num_heads, d)
    q = jnp.transpose(q, (1, 0, 2))                     # [BH, S, d]
    kT = jnp.transpose(k, (1, 2, 0))                    # [BH, d, S]
    v = jnp.transpose(v, (1, 0, 2))                     # [BH, S, d]
    scores = jnp.einsum("bsd,bdt->bst", q, kT) / math.sqrt(d)
    scores = scores.reshape(B, num_heads, S, S) + attention_mask
    probs = jax.nn.softmax(scores, axis=-1).reshape(B * num_heads, S, S)
    ctx = jnp.einsum("bst,btd->bsd", probs, v)          # [BH, S, d]
    ctx = jnp.transpose(ctx, (1, 0, 2)).reshape(S, B, H)
    return ctx


if __name__ == "__main__":
    # Small deterministic config: seq=16, batch=2, hidden=32, heads=4 (d=8).
    S, B, H, NH = 16, 2, 32, 4

    key = jax.random.PRNGKey(0)
    ks = jax.random.split(key, 8)
    params = {
        "wq": 0.1 * jax.random.normal(ks[0], (H, H), jnp.float32),
        "wk": 0.1 * jax.random.normal(ks[1], (H, H), jnp.float32),
        "wv": 0.1 * jax.random.normal(ks[2], (H, H), jnp.float32),
        "bq": 0.1 * jax.random.normal(ks[3], (H,), jnp.float32),
        "bk": 0.1 * jax.random.normal(ks[4], (H,), jnp.float32),
        "bv": 0.1 * jax.random.normal(ks[5], (H,), jnp.float32),
    }
    hidden_states = jax.random.normal(ks[6], (S, B, H), jnp.float32)  # [S, B, H]
    # Additive attention mask [B, 1, 1, S]: last three keys of batch 1 masked.
    pad = jnp.ones((B, S), jnp.float32).at[1, -3:].set(0.0)
    attention_mask = ((1.0 - pad) * -10000.0).reshape(B, 1, 1, S)

    ref = _reference(hidden_states, attention_mask, params, NH)

    # f32 MXU path, single query tile (tolerance covers the approx reciprocal).
    wqkv32, bqkv32 = prepare_bert_attention_params(params, NH, jnp.float32)
    out_f32 = bert_self_attention(hidden_states, attention_mask, wqkv32, bqkv32,
                                  NH, out_dtype=jnp.float32)
    out_f32 = jax.block_until_ready(out_f32)
    assert out_f32.shape == (S, B, H)
    assert jnp.allclose(out_f32, ref, atol=2e-3, rtol=2e-3), "f32 mismatch"

    # Default bf16 path with query tiling (exercises pl.when + scratch carry).
    wqkv16, bqkv16 = prepare_bert_attention_params(params, NH)
    out_bf16 = bert_self_attention(hidden_states, attention_mask, wqkv16, bqkv16,
                                   NH, q_tile=8)
    out_bf16 = jax.block_until_ready(out_bf16)
    assert out_bf16.shape == (S, B, H)
    assert jnp.allclose(out_bf16.astype(jnp.float32), ref,
                        atol=3e-2, rtol=3e-2), "bf16 mismatch"

    # bf16 + bf16 exp (v6e/v7x EUP path); softmax stats stay f32.
    out_bf16e = bert_self_attention(hidden_states, attention_mask, wqkv16,
                                    bqkv16, NH, q_tile=8, bf16_exp=True)
    out_bf16e = jax.block_until_ready(out_bf16e)
    assert jnp.allclose(out_bf16e.astype(jnp.float32), ref,
                        atol=6e-2, rtol=6e-2), "bf16-exp mismatch"

    print("KERNEL_OK")
</pallas_src>

<mosaic_0001>
module attributes {stable_mosaic.version = 11 : i64} {
  func.func @_bert_attn_kernel(%arg0: i32, %arg1: i32, %arg2: memref<1x16x32xf32, #tpu.memory_space<vmem>>, %arg3: memref<32x96xf32, #tpu.memory_space<vmem>>, %arg4: memref<1x96xf32, #tpu.memory_space<vmem>>, %arg5: memref<1x1x16xf32, #tpu.memory_space<vmem>>, %arg6: memref<1x16x32xf32, #tpu.memory_space<vmem>>, %arg7: memref<16x96xf32, #tpu.memory_space<vmem>>) attributes {dimension_semantics = [#tpu.dimension_semantics<parallel>, #tpu.dimension_semantics<arbitrary>], iteration_bounds = array<i64: 2, 1>, scalar_prefetch = 0 : i64, scratch_operands = 1 : i64, tpu.core_type = #tpu.core_type<tc>, window_params = [{transform_indices = @transform_0, window_bounds = array<i64: 1, 16, 32>}, {pipeline_mode = #tpu.pipeline_mode<synchronous>, transform_indices = @transform_1, window_bounds = array<i64: 32, 96>}, {pipeline_mode = #tpu.pipeline_mode<synchronous>, transform_indices = @transform_2, window_bounds = array<i64: 1, 96>}, {transform_indices = @transform_3, window_bounds = array<i64: 1, 1, 16>}, {transform_indices = @transform_4, window_bounds = array<i64: 1, 16, 32>}]} {
    %c0 = arith.constant 0 : index
    %c0_0 = arith.constant 0 : index
    %c0_1 = arith.constant 0 : index
    %0 = vector.load %arg2[%c0, %c0_0, %c0_1] : memref<1x16x32xf32, #tpu.memory_space<vmem>>, vector<1x16x32xf32>
    %1 = vector.shape_cast %0 : vector<1x16x32xf32> to vector<16x32xf32>
    %c0_2 = arith.constant 0 : index
    %c0_3 = arith.constant 0 : index
    %c0_4 = arith.constant 0 : index
    %2 = vector.load %arg5[%c0_2, %c0_3, %c0_4] : memref<1x1x16xf32, #tpu.memory_space<vmem>>, vector<1x1x16xf32>
    %3 = vector.shape_cast %2 : vector<1x1x16xf32> to vector<1x16xf32>
    %c0_i32 = arith.constant 0 : i32
    %4 = arith.cmpi eq, %arg1, %c0_i32 : i32
    %5 = arith.extui %4 : i1 to i32
    %c0_i32_5 = arith.constant 0 : i32
    %6 = arith.cmpi ne, %5, %c0_i32_5 : i32
    scf.if %6 {
      %c0_42 = arith.constant 0 : index
      %c0_43 = arith.constant 0 : index
      %93 = vector.load %arg3[%c0_42, %c0_43] : memref<32x96xf32, #tpu.memory_space<vmem>>, vector<32x96xf32>
      %cst_44 = arith.constant dense<0.000000e+00> : vector<16x96xf32>
      %94 = tpu.matmul %1, %93, %cst_44 {dimension_numbers = #tpu.dot_dimension_numbers<[1], [0], [0], [1], [0, 0, 1, 1], [], []>} : vector<16x32xf32>, vector<32x96xf32>, vector<16x96xf32> -> vector<16x96xf32>
      %c0_45 = arith.constant 0 : index
      %c0_46 = arith.constant 0 : index
      %95 = vector.load %arg4[%c0_45, %c0_46] : memref<1x96xf32, #tpu.memory_space<vmem>>, vector<1x96xf32>
      %96 = vector.broadcast %95 : vector<1x96xf32> to vector<16x96xf32>
      %97 = arith.addf %94, %96 : vector<16x96xf32>
      %c0_47 = arith.constant 0 : index
      %c0_48 = arith.constant 0 : index
      %98 = vector.load %arg7[%c0_47, %c0_48] : memref<16x96xf32, #tpu.memory_space<vmem>>, vector<16x96xf32>
      tpu.vector_store %arg7[%c0_47, %c0_48], %97 {strides = array<i32>} : memref<16x96xf32, #tpu.memory_space<vmem>>, vector<16x96xf32>,
    } else {
    }
    %c16_i32 = arith.constant 16 : i32
    %7 = arith.muli %arg1, %c16_i32 : i32
    %8 = tpu.assume_multiple %7, 16 : i32
    %9 = arith.index_cast %8 : i32 to index
    %c0_6 = arith.constant 0 : index
    %10 = vector.load %arg7[%9, %c0_6] : memref<16x96xf32, #tpu.memory_space<vmem>>, vector<16x8xf32>
    %c0_7 = arith.constant 0 : index
    %c32 = arith.constant 32 : index
    %11 = vector.load %arg7[%c0_7, %c32] : memref<16x96xf32, #tpu.memory_space<vmem>>, vector<16x8xf32>
    %c0_8 = arith.constant 0 : index
    %c64 = arith.constant 64 : index
    %12 = vector.load %arg7[%c0_8, %c64] : memref<16x96xf32, #tpu.memory_space<vmem>>, vector<16x8xf32>
    %cst = arith.constant dense<0.000000e+00> : vector<16x16xf32>
    %13 = tpu.matmul %10, %11, %cst {dimension_numbers = #tpu.dot_dimension_numbers<[1], [1], [0], [0], [0, 0, 1, 0], [], []>} : vector<16x8xf32>, vector<16x8xf32>, vector<16x16xf32> -> vector<16x16xf32>
    %14 = vector.broadcast %3 : vector<1x16xf32> to vector<16x16xf32>
    %15 = arith.addf %13, %14 : vector<16x16xf32>
    %cst_9 = arith.constant dense<0xFF800000> : vector<16xf32>
    %16 = vector.multi_reduction <maximumf>, %15, %cst_9 [1] : vector<16x16xf32> to vector<16xf32>
    %17 = vector.shape_cast %16 : vector<16xf32> to vector<16x1xf32>
    %18 = vector.broadcast %17 : vector<16x1xf32> to vector<16x16xf32>
    %19 = arith.subf %15, %18 : vector<16x16xf32>
    %20 = math.exp %19 : vector<16x16xf32>
    %cst_10 = arith.constant dense<0.000000e+00> : vector<16xf32>
    %21 = vector.multi_reduction <add>, %20, %cst_10 [1] : vector<16x16xf32> to vector<16xf32>
    %22 = vector.shape_cast %21 : vector<16xf32> to vector<16x1xf32>
    %cst_11 = arith.constant dense<0.000000e+00> : vector<16x8xf32>
    %23 = tpu.matmul %20, %12, %cst_11 {dimension_numbers = #tpu.dot_dimension_numbers<[1], [0], [0], [1], [0, 0, 1, 1], [], []>} : vector<16x16xf32>, vector<16x8xf32>, vector<16x8xf32> -> vector<16x8xf32>
    %24 = tpu.reciprocal %22 {approx = true} : vector<16x1xf32> -> vector<16x1xf32>
    %25 = vector.broadcast %24 : vector<16x1xf32> to vector<16x8xf32>
    %26 = arith.mulf %23, %25 : vector<16x8xf32>
    %c0_12 = arith.constant 0 : index
    %c0_13 = arith.constant 0 : index
    %c0_14 = arith.constant 0 : index
    %27 = vector.load %arg6[%c0_12, %c0_13, %c0_14] : memref<1x16x32xf32, #tpu.memory_space<vmem>>, vector<1x16x8xf32>
    %28 = vector.shape_cast %27 : vector<1x16x8xf32> to vector<16x8xf32>
    %29 = vector.shape_cast %26 : vector<16x8xf32> to vector<1x16x8xf32>
    tpu.vector_store %arg6[%c0_12, %c0_13, %c0_14], %29 {strides = array<i32>} : memref<1x16x32xf32, #tpu.memory_space<vmem>>, vector<1x16x8xf32>,
    %30 = arith.index_cast %8 : i32 to index
    %c8 = arith.constant 8 : index
    %31 = vector.load %arg7[%30, %c8] : memref<16x96xf32, #tpu.memory_space<vmem>>, vector<16x8xf32>
    %c0_15 = arith.constant 0 : index
    %c40 = arith.constant 40 : index
    %32 = vector.load %arg7[%c0_15, %c40] : memref<16x96xf32, #tpu.memory_space<vmem>>, vector<16x8xf32>
    %c0_16 = arith.constant 0 : index
    %c72 = arith.constant 72 : index
    %33 = vector.load %arg7[%c0_16, %c72] : memref<16x96xf32, #tpu.memory_space<vmem>>, vector<16x8xf32>
    %cst_17 = arith.constant dense<0.000000e+00> : vector<16x16xf32>
    %34 = tpu.matmul %31, %32, %cst_17 {dimension_numbers = #tpu.dot_dimension_numbers<[1], [1], [0], [0], [0, 0, 1, 0], [], []>} : vector<16x8xf32>, vector<16x8xf32>, vector<16x16xf32> -> vector<16x16xf32>
    %35 = vector.broadcast %3 : vector<1x16xf32> to vector<16x16xf32>
    %36 = arith.addf %34, %35 : vector<16x16xf32>
    %cst_18 = arith.constant dense<0xFF800000> : vector<16xf32>
    %37 = vector.multi_reduction <maximumf>, %36, %cst_18 [1] : vector<16x16xf32> to vector<16xf32>
    %38 = vector.shape_cast %37 : vector<16xf32> to vector<16x1xf32>
    %39 = vector.broadcast %38 : vector<16x1xf32> to vector<16x16xf32>
    %40 = arith.subf %36, %39 : vector<16x16xf32>
    %41 = math.exp %40 : vector<16x16xf32>
    %cst_19 = arith.constant dense<0.000000e+00> : vector<16xf32>
    %42 = vector.multi_reduction <add>, %41, %cst_19 [1] : vector<16x16xf32> to vector<16xf32>
    %43 = vector.shape_cast %42 : vector<16xf32> to vector<16x1xf32>
    %cst_20 = arith.constant dense<0.000000e+00> : vector<16x8xf32>
    %44 = tpu.matmul %41, %33, %cst_20 {dimension_numbers = #tpu.dot_dimension_numbers<[1], [0], [0], [1], [0, 0, 1, 1], [], []>} : vector<16x16xf32>, vector<16x8xf32>, vector<16x8xf32> -> vector<16x8xf32>
    %45 = tpu.reciprocal %43 {approx = true} : vector<16x1xf32> -> vector<16x1xf32>
    %46 = vector.broadcast %45 : vector<16x1xf32> to vector<16x8xf32>
    %47 = arith.mulf %44, %46 : vector<16x8xf32>
    %c0_21 = arith.constant 0 : index
    %c0_22 = arith.constant 0 : index
    %c8_23 = arith.constant 8 : index
    %48 = vector.load %arg6[%c0_21, %c0_22, %c8_23] : memref<1x16x32xf32, #tpu.memory_space<vmem>>, vector<1x16x8xf32>
    %49 = vector.shape_cast %48 : vector<1x16x8xf32> to vector<16x8xf32>
    %50 = vector.shape_cast %47 : vector<16x8xf32> to vector<1x16x8xf32>
    tpu.vector_store %arg6[%c0_21, %c0_22, %c8_23], %50 {strides = array<i32>} : memref<1x16x32xf32, #tpu.memory_space<vmem>>, vector<1x16x8xf32>,
    %51 = arith.index_cast %8 : i32 to index
    %c16 = arith.constant 16 : index
    %52 = vector.load %arg7[%51, %c16] : memref<16x96xf32, #tpu.memory_space<vmem>>, vector<16x8xf32>
    %c0_24 = arith.constant 0 : index
    %c48 = arith.constant 48 : index
    %53 = vector.load %arg7[%c0_24, %c48] : memref<16x96xf32, #tpu.memory_space<vmem>>, vector<16x8xf32>
    %c0_25 = arith.constant 0 : index
    %c80 = arith.constant 80 : index
    %54 = vector.load %arg7[%c0_25, %c80] : memref<16x96xf32, #tpu.memory_space<vmem>>, vector<16x8xf32>
    %cst_26 = arith.constant dense<0.000000e+00> : vector<16x16xf32>
    %55 = tpu.matmul %52, %53, %cst_26 {dimension_numbers = #tpu.dot_dimension_numbers<[1], [1], [0], [0], [0, 0, 1, 0], [], []>} : vector<16x8xf32>, vector<16x8xf32>, vector<16x16xf32> -> vector<16x16xf32>
    %56 = vector.broadcast %3 : vector<1x16xf32> to vector<16x16xf32>
    %57 = arith.addf %55, %56 : vector<16x16xf32>
    %cst_27 = arith.constant dense<0xFF800000> : vector<16xf32>
    %58 = vector.multi_reduction <maximumf>, %57, %cst_27 [1] : vector<16x16xf32> to vector<16xf32>
    %59 = vector.shape_cast %58 : vector<16xf32> to vector<16x1xf32>
    %60 = vector.broadcast %59 : vector<16x1xf32> to vector<16x16xf32>
    %61 = arith.subf %57, %60 : vector<16x16xf32>
    %62 = math.exp %61 : vector<16x16xf32>
    %cst_28 = arith.constant dense<0.000000e+00> : vector<16xf32>
    %63 = vector.multi_reduction <add>, %62, %cst_28 [1] : vector<16x16xf32> to vector<16xf32>
    %64 = vector.shape_cast %63 : vector<16xf32> to vector<16x1xf32>
    %cst_29 = arith.constant dense<0.000000e+00> : vector<16x8xf32>
    %65 = tpu.matmul %62, %54, %cst_29 {dimension_numbers = #tpu.dot_dimension_numbers<[1], [0], [0], [1], [0, 0, 1, 1], [], []>} : vector<16x16xf32>, vector<16x8xf32>, vector<16x8xf32> -> vector<16x8xf32>
    %66 = tpu.reciprocal %64 {approx = true} : vector<16x1xf32> -> vector<16x1xf32>
    %67 = vector.broadcast %66 : vector<16x1xf32> to vector<16x8xf32>
    %68 = arith.mulf %65, %67 : vector<16x8xf32>
    %c0_30 = arith.constant 0 : index
    %c0_31 = arith.constant 0 : index
    %c16_32 = arith.constant 16 : index
    %69 = vector.load %arg6[%c0_30, %c0_31, %c16_32] : memref<1x16x32xf32, #tpu.memory_space<vmem>>, vector<1x16x8xf32>
    %70 = vector.shape_cast %69 : vector<1x16x8xf32> to vector<16x8xf32>
    %71 = vector.shape_cast %68 : vector<16x8xf32> to vector<1x16x8xf32>
    tpu.vector_store %arg6[%c0_30, %c0_31, %c16_32], %71 {strides = array<i32>} : memref<1x16x32xf32, #tpu.memory_space<vmem>>, vector<1x16x8xf32>,
    %72 = arith.index_cast %8 : i32 to index
    %c24 = arith.constant 24 : index
    %73 = vector.load %arg7[%72, %c24] : memref<16x96xf32, #tpu.memory_space<vmem>>, vector<16x8xf32>
    %c0_33 = arith.constant 0 : index
    %c56 = arith.constant 56 : index
    %74 = vector.load %arg7[%c0_33, %c56] : memref<16x96xf32, #tpu.memory_space<vmem>>, vector<16x8xf32>
    %c0_34 = arith.constant 0 : index
    %c88 = arith.constant 88 : index
    %75 = vector.load %arg7[%c0_34, %c88] : memref<16x96xf32, #tpu.memory_space<vmem>>, vector<16x8xf32>
    %cst_35 = arith.constant dense<0.000000e+00> : vector<16x16xf32>
    %76 = tpu.matmul %73, %74, %cst_35 {dimension_numbers = #tpu.dot_dimension_numbers<[1], [1], [0], [0], [0, 0, 1, 0], [], []>} : vector<16x8xf32>, vector<16x8xf32>, vector<16x16xf32> -> vector<16x16xf32>
    %77 = vector.broadcast %3 : vector<1x16xf32> to vector<16x16xf32>
    %78 = arith.addf %76, %77 : vector<16x16xf32>
    %cst_36 = arith.constant dense<0xFF800000> : vector<16xf32>
    %79 = vector.multi_reduction <maximumf>, %78, %cst_36 [1] : vector<16x16xf32> to vector<16xf32>
    %80 = vector.shape_cast %79 : vector<16xf32> to vector<16x1xf32>
    %81 = vector.broadcast %80 : vector<16x1xf32> to vector<16x16xf32>
    %82 = arith.subf %78, %81 : vector<16x16xf32>
    %83 = math.exp %82 : vector<16x16xf32>
    %cst_37 = arith.constant dense<0.000000e+00> : vector<16xf32>
    %84 = vector.multi_reduction <add>, %83, %cst_37 [1] : vector<16x16xf32> to vector<16xf32>
    %85 = vector.shape_cast %84 : vector<16xf32> to vector<16x1xf32>
    %cst_38 = arith.constant dense<0.000000e+00> : vector<16x8xf32>
    %86 = tpu.matmul %83, %75, %cst_38 {dimension_numbers = #tpu.dot_dimension_numbers<[1], [0], [0], [1], [0, 0, 1, 1], [], []>} : vector<16x16xf32>, vector<16x8xf32>, vector<16x8xf32> -> vector<16x8xf32>
    %87 = tpu.reciprocal %85 {approx = true} : vector<16x1xf32> -> vector<16x1xf32>
    %88 = vector.broadcast %87 : vector<16x1xf32> to vector<16x8xf32>
    %89 = arith.mulf %86, %88 : vector<16x8xf32>
    %c0_39 = arith.constant 0 : index
    %c0_40 = arith.constant 0 : index
    %c24_41 = arith.constant 24 : index
    %90 = vector.load %arg6[%c0_39, %c0_40, %c24_41] : memref<1x16x32xf32, #tpu.memory_space<vmem>>, vector<1x16x8xf32>
    %91 = vector.shape_cast %90 : vector<1x16x8xf32> to vector<16x8xf32>
    %92 = vector.shape_cast %89 : vector<16x8xf32> to vector<1x16x8xf32>
    tpu.vector_store %arg6[%c0_39, %c0_40, %c24_41], %92 {strides = array<i32>} : memref<1x16x32xf32, #tpu.memory_space<vmem>>, vector<1x16x8xf32>,
    return
  }
  func.func @transform_0(%arg0: i32, %arg1: i32) -> (i32, i32, i32) {
    %c0_i32 = arith.constant 0 : i32
    %c0_i32_0 = arith.constant 0 : i32
    %c0_i32_1 = arith.constant 0 : i32
    return %arg0, %c0_i32, %c0_i32_0 : i32, i32, i32
  }
  func.func @transform_1(%arg0: i32, %arg1: i32) -> (i32, i32) {
    %c0_i32 = arith.constant 0 : i32
    %c0_i32_0 = arith.constant 0 : i32
    %c0_i32_1 = arith.constant 0 : i32
    return %c0_i32, %c0_i32_0 : i32, i32
  }
  func.func @transform_2(%arg0: i32, %arg1: i32) -> (i32, i32) {
    %c0_i32 = arith.constant 0 : i32
    %c0_i32_0 = arith.constant 0 : i32
    %c0_i32_1 = arith.constant 0 : i32
    return %c0_i32, %c0_i32_0 : i32, i32
  }
  func.func @transform_3(%arg0: i32, %arg1: i32) -> (i32, i32, i32) {
    %c0_i32 = arith.constant 0 : i32
    %c0_i32_0 = arith.constant 0 : i32
    %c0_i32_1 = arith.constant 0 : i32
    return %arg0, %c0_i32, %c0_i32_0 : i32, i32, i32
  }
  func.func @transform_4(%arg0: i32, %arg1: i32) -> (i32, i32, i32) {
    %c0_i32 = arith.constant 0 : i32
    %c0_i32_0 = arith.constant 0 : i32
    return %arg0, %arg1, %c0_i32 : i32, i32, i32
  }
}

</mosaic_0001>

<llo_original>
// kernel: tpu_custom_call.1
$region0: #{tpu_custom_call.1}
  #allocation0 [shape = 'u32[]', space=smem, size = 0x4, offset = 0x4, fixed_abs, tag = 'smem constant byte address 0x4 - core index']
  #allocation1 [shape = 'u32[72,128]{1,0:T(1,128)}', space=vmem, size = 0x9000, scoped, tag = 'internal scratch']
  #allocation2 [shape = 'f32[16,96]{1,0:T(8,128)}', space=vmem, size = 0x2000, scoped, tag = 'scratch operand']
  %s0 = inlined_call_operand.hbm [shape: f32[2,16,32], index: 0, kind: input, shape index: {}]
  %s1 = inlined_call_operand.hbm [shape: f32[32,96], index: 1, kind: input, shape index: {}]
  %s2 = inlined_call_operand.hbm [shape: f32[1,96], index: 2, kind: input, shape index: {}]
  %s3 = inlined_call_operand.vmem [shape: f32[2,1,16], index: 3, kind: input, shape index: {}]
  %s4 = inlined_call_operand.hbm [shape: f32[2,16,32], index: 4, kind: output, shape index: {}]
  %s5 = sld [smem:[#allocation0]]
  $region65: #{tpu_custom_call.1} parent=0
    _
  %s7 = ssub.s32 1, %s5
  %s8 = scalar_select 0, %s7, %s5
  $region1: #{tpu_custom_call.1} parent=0
    #allocation3 [shape = 'u8[16384]{0}', space=vmem, size = 0x4000, scoped, tag = 'input window, operand 0']
    #allocation4 [shape = 's32[2]{0}', space=sflag, size = 0x8, scoped, tag = 'scoped memory for tpu_custom_call.1']
    #allocation5 [shape = 's32[2]{0}', space=sflag, size = 0x8, scoped, tag = 'scoped memory for tpu_custom_call.1']
    #allocation6 [shape = 'u8[16384]{0}', space=vmem, size = 0x4000, scoped, tag = 'input window, operand 1, single buffered']
    #allocation7 [shape = 's32[1]{0}', space=sflag, size = 0x4, scoped, tag = 'scoped memory for tpu_custom_call.1']
    #allocation8 [shape = 'u8[512]{0}', space=vmem, size = 0x400, scoped, tag = 'input window, operand 2, single buffered']
    #allocation9 [shape = 'u8[16384]{0}', space=vmem, size = 0x4000, scoped, tag = 'output window, operand 0']
    %9 = vsyncpa [#allocation4], 0
    %s10 = scalar_lea.sflag [#allocation4], 1
    %11 = vsyncpa %s10, 0
    %12 = vsyncpa [#allocation7], 0
    %13 = vsyncpa [#allocation5], 0
    %s14 = scalar_lea.sflag [#allocation5], 1
    %15 = vsyncpa %s14, 0
    loop: start=0, step=1, limit=4
    $region2: #{tpu_custom_call.1} parent=1 // loop_pre_header
      _
    $region3: #{tpu_custom_call.1} parent=1 // loop_header
      %s17 = sphi 0, %s21
      %p18 = scmp.ge.s32.totalorder %s17, 4
      %s24 = sphi 0, %s36
      %s25 = sphi 0, %s32
      %s26 = sphi 0, %s24
      %s27 = sphi 0, %s25
      %s28 = sphi 0, %s26
      %s29 = sphi 0, %s27
      %s39 = sphi 0, %s41
      %s42 = sphi 0, %s39
      %s43 = sphi 0, %s42
      %s59 = sphi 0, %s43
      %s63 = sphi 0, %s63
      %s65 = sphi 0, %s63
      %s66 = sphi 0, %s65
      %s80 = sphi 0, %s66
      %s84 = sphi 0, %s84
      %s86 = sphi 0, %s84
      %s87 = sphi 0, %s86
      %s101 = sphi 0, %s87
      %s107 = sphi 0, %s109
      %s110 = sphi 0, %s107
      %s111 = sphi 0, %s110
      %s127 = sphi 0, %s111
      %s135 = sphi 0, %s137
      %s138 = sphi 0, %s135
      %s139 = sphi 0, %s138
      %s155 = sphi 0, %s139
    $region4: #{tpu_custom_call.1} parent=1 // loop_header_branch
      %20 = sbr.rel (%p18) target = $region8
    $region5: #{tpu_custom_call.1} parent=1 // loop_body
      %s22 = ssub.s32 %s17, 1
      %s23 = ssub.s32 %s17, 2
      %s30 = sadd.s32 1, %s25
      %p31 = scmp.ge.s32.totalorder %s30, 1
      %s32 = scalar_select %p31, 0, %s30
      %s33 = sadd.s32 1, %s24
      %s34 = scalar_select %p31, %s33, %s24
      %p35 = scmp.ge.s32.totalorder %s34, 2
      %s36 = scalar_select %p35, 0, %s34
      %s37 = ssub.s32 %s24, %s36
      %p38 = scmp.eq.s32.totalorder %s37, 0
      %s40 = sadd.s32 %s39, 1
      %s41 = scalar_select %p38, %s39, %s40
      %p44 = pneg %p38
      %p45 = scmp.eq.s32.totalorder %s17, 1
      %p46 = por %p44, %p45
      %p47 = scmp.ne.s32.totalorder %s39, %s42
      %p48 = scmp.eq.s32.totalorder %s17, 0
      %p49 = por %p47, %p48
      %p50 = scmp.ne.s32.totalorder %s39, %s42
      %p51 = scmp.eq.s32.totalorder %s22, 1
      %p52 = por %p50, %p51
      %p53 = scmp.ne.s32.totalorder %s42, %s43
      %p54 = scmp.eq.s32.totalorder %s22, 0
      %p55 = por %p53, %p54
      %p56 = scmp.ne.s32.totalorder %s42, %s43
      %p57 = scmp.eq.s32.totalorder %s23, 1
      %p58 = por %p56, %p57
      %p60 = scmp.ne.s32.totalorder %s43, %s59
      %p61 = scmp.eq.s32.totalorder %s23, 0
      %p62 = por %p60, %p61
      %s64 = sadd.s32 %s63, 1
      %p67 = scmp.eq.s32.totalorder %s17, 1
      %p68 = scmp.ne.s32.totalorder %s63, %s65
      %p69 = scmp.eq.s32.totalorder %s17, 0
      %p70 = por %p68, %p69
      %p71 = scmp.ne.s32.totalorder %s63, %s65
      %p72 = scmp.eq.s32.totalorder %s22, 1
      %p73 = por %p71, %p72
      %p74 = scmp.ne.s32.totalorder %s65, %s66
      %p75 = scmp.eq.s32.totalorder %s22, 0
      %p76 = por %p74, %p75
      %p77 = scmp.ne.s32.totalorder %s65, %s66
      %p78 = scmp.eq.s32.totalorder %s23, 1
      %p79 = por %p77, %p78
      %p81 = scmp.ne.s32.totalorder %s66, %s80
      %p82 = scmp.eq.s32.totalorder %s23, 0
      %p83 = por %p81, %p82
      %s85 = sadd.s32 %s84, 1
      %p88 = scmp.eq.s32.totalorder %s17, 1
      %p89 = scmp.ne.s32.totalorder %s84, %s86
      %p90 = scmp.eq.s32.totalorder %s17, 0
      %p91 = por %p89, %p90
      %p92 = scmp.ne.s32.totalorder %s84, %s86
      %p93 = scmp.eq.s32.totalorder %s22, 1
      %p94 = por %p92, %p93
      %p95 = scmp.ne.s32.totalorder %s86, %s87
      %p96 = scmp.eq.s32.totalorder %s22, 0
      %p97 = por %p95, %p96
      %p98 = scmp.ne.s32.totalorder %s86, %s87
      %p99 = scmp.eq.s32.totalorder %s23, 1
      %p100 = por %p98, %p99
      %p102 = scmp.ne.s32.totalorder %s87, %s101
      %p103 = scmp.eq.s32.totalorder %s23, 0
      %p104 = por %p102, %p103
      %s105 = ssub.s32 %s24, %s36
      %p106 = scmp.eq.s32.totalorder %s105, 0
      %s108 = sadd.s32 %s107, 1
      %s109 = scalar_select %p106, %s107, %s108
      %p112 = pneg %p106
      %p113 = scmp.eq.s32.totalorder %s17, 1
      %p114 = por %p112, %p113
      %p115 = scmp.ne.s32.totalorder %s107, %s110
      %p116 = scmp.eq.s32.totalorder %s17, 0
      %p117 = por %p115, %p116
      %p118 = scmp.ne.s32.totalorder %s107, %s110
      %p119 = scmp.eq.s32.totalorder %s22, 1
      %p120 = por %p118, %p119
      %p121 = scmp.ne.s32.totalorder %s110, %s111
      %p122 = scmp.eq.s32.totalorder %s22, 0
      %p123 = por %p121, %p122
      %p124 = scmp.ne.s32.totalorder %s110, %s111
      %p125 = scmp.eq.s32.totalorder %s23, 1
      %p126 = por %p124, %p125
      %p128 = scmp.ne.s32.totalorder %s111, %s127
      %p129 = scmp.eq.s32.totalorder %s23, 0
      %p130 = por %p128, %p129
      %s131 = ssub.s32 %s24, %s36
      %s132 = ssub.s32 %s25, %s32
      %s133 = sor.u32 %s131, %s132
      %p134 = scmp.eq.s32.totalorder %s133, 0
      %s136 = sadd.s32 %s135, 1
      %s137 = scalar_select %p134, %s135, %s136
      %p140 = pneg %p134
      %p141 = scmp.eq.s32.totalorder %s17, 1
      %p142 = por %p140, %p141
      %p143 = scmp.ne.s32.totalorder %s135, %s138
      %p144 = scmp.eq.s32.totalorder %s17, 0
      %p145 = por %p143, %p144
      %p146 = scmp.ne.s32.totalorder %s135, %s138
      %p147 = scmp.eq.s32.totalorder %s22, 1
      %p148 = por %p146, %p147
      %p149 = scmp.ne.s32.totalorder %s138, %s139
      %p150 = scmp.eq.s32.totalorder %s22, 0
      %p151 = por %p149, %p150
      %p152 = scmp.ne.s32.totalorder %s138, %s139
      %p153 = scmp.eq.s32.totalorder %s23, 1
      %p154 = por %p152, %p153
      %p156 = scmp.ne.s32.totalorder %s139, %s155
      %p157 = scmp.eq.s32.totalorder %s23, 0
      %p158 = por %p156, %p157
      %p159 = scmp.le.s32.totalorder 1, %s17
      %p160 = scmp.lt.s32.totalorder %s17, 3
      %p161 = pnand %p159, %p160
      %p162 = pneg %p161
      // Predicated region
      $region9: #{tpu_custom_call.1} parent=5 // pred_check
        _
      $region10: #{tpu_custom_call.1} parent=5 // pred_check_branch
        %164 = sbr.rel (%p161) target = $region12
      $region11: #{tpu_custom_call.1} parent=5 // pred_region
        %s165 = ssub.s32 %s17, 1
        // Predicated region
        $region13: #{tpu_custom_call.1} parent=11 // pred_check
          %p166 = pneg %p76
        $region14: #{tpu_custom_call.1} parent=11 // pred_check_branch
          %168 = sbr.rel (%p166) target = $region16
        $region15: #{tpu_custom_call.1} parent=11 // pred_region
          %170 = vsyncadd [#allocation7], 0
          %s171 = sshll.u32 %s1, 4
          %s172 = int_to_ptr.hbm [resolvable:$true] %s171
          %s173 = sshll.u32 [#allocation6], 4
          %s174 = int_to_ptr.vmem [resolvable:$true] %s173
          %179 = dma.hbm_to_vmem [thread:$0]  %s172, 512, %s174, [#allocation7], 128, 128, 8
        $region16: #{tpu_custom_call.1} parent=11 // pred_fallthru
          _
        // Predicated region
        $region17: #{tpu_custom_call.1} parent=11 // pred_check
          %p180 = pneg %p97
        $region18: #{tpu_custom_call.1} parent=11 // pred_check_branch
          %182 = sbr.rel (%p180) target = $region20
        $region19: #{tpu_custom_call.1} parent=11 // pred_region
          %184 = vsyncadd [#allocation7], 0
          %s186 = sshll.u32 %s2, 4
          %s187 = int_to_ptr.hbm [resolvable:$true] %s186
          %s188 = sshll.u32 [#allocation8], 4
          %s189 = int_to_ptr.vmem [resolvable:$true] %s188
          %191 = dma.hbm_to_vmem [thread:$0]  %s187, 16, %s189, [#allocation7]
        $region20: #{tpu_custom_call.1} parent=11 // pred_fallthru
          _
      $region12: #{tpu_custom_call.1} parent=5 // pred_fallthru
        _
      %p192 = scmp.lt.s32.totalorder %s17, 2
      // Predicated region
      $region21: #{tpu_custom_call.1} parent=5 // pred_check
        %p193 = pneg %p192
      $region22: #{tpu_custom_call.1} parent=5 // pred_check_branch
        %195 = sbr.rel (%p193) target = $region24
      $region23: #{tpu_custom_call.1} parent=5 // pred_region
        // Predicated region
        $region25: #{tpu_custom_call.1} parent=23 // pred_check
          %p196 = pneg %p49
        $region26: #{tpu_custom_call.1} parent=23 // pred_check_branch
          %198 = sbr.rel (%p196) target = $region28
        $region27: #{tpu_custom_call.1} parent=23 // pred_region
          %s199 = sand.u32 %s39, 1
          %s200 = scalar_lea.sflag [#allocation4], %s199
          %s201 = sand.u32 %s39, 1
          %s202 = smul.addr %s201, 16
          %s203 = scalar_lea.vmem [#allocation3], %s202
          %205 = vsyncadd %s200, 0
          %s206 = smul.addr %s24, 2
          %s207 = smul.addr %s206, 8
          %s208 = scalar_lea.hbm %s0, %s207
          %s209 = sshll.u32 %s208, 4
          %s210 = int_to_ptr.hbm [resolvable:$true] %s209
          %s211 = sshll.u32 %s203, 4
          %s212 = int_to_ptr.vmem [resolvable:$true] %s211
          %217 = dma.hbm_to_vmem [thread:$0]  %s210, 256, %s212, %s200, 128, 128, 8
        $region28: #{tpu_custom_call.1} parent=23 // pred_fallthru
          _
        // Predicated region
        $region29: #{tpu_custom_call.1} parent=23 // pred_check
          %p218 = pneg %p117
        $region30: #{tpu_custom_call.1} parent=23 // pred_check_branch
          %220 = sbr.rel (%p218) target = $region32
        $region31: #{tpu_custom_call.1} parent=23 // pred_region
          %p221 = scmp.lt.s32.totalorder %s24, 1
          %s222 = scalar_select %p221, %s24, 1
          %s223 = scalar_lea.vmem %s3, %s222
        $region32: #{tpu_custom_call.1} parent=23 // pred_fallthru
          _
      $region24: #{tpu_custom_call.1} parent=5 // pred_fallthru
        _
      %p224 = scmp.le.s32.totalorder 1, %s17
      %p225 = scmp.lt.s32.totalorder %s17, 3
      %p226 = pnand %p224, %p225
      %p227 = pneg %p226
      // Predicated region
      $region33: #{tpu_custom_call.1} parent=5 // pred_check
        _
      $region34: #{tpu_custom_call.1} parent=5 // pred_check_branch
        %229 = sbr.rel (%p226) target = $region36
      $region35: #{tpu_custom_call.1} parent=5 // pred_region
        %s230 = ssub.s32 %s17, 1
        %s231 = sand.u32 %s42, 1
        %s232 = scalar_lea.sflag [#allocation4], %s231
        %s233 = sand.u32 %s42, 1
        %s234 = smul.addr %s233, 16
        %s235 = scalar_lea.vmem [#allocation3], %s234
        // Predicated region
        $region37: #{tpu_custom_call.1} parent=35 // pred_check
          %p236 = pneg %p55
        $region38: #{tpu_custom_call.1} parent=35 // pred_check_branch
          %238 = sbr.rel (%p236) target = $region40
        $region39: #{tpu_custom_call.1} parent=35 // pred_region
          %240 = dma.done %s232, 256
        $region40: #{tpu_custom_call.1} parent=35 // pred_fallthru
          _
        // Predicated region
        $region41: #{tpu_custom_call.1} parent=35 // pred_check
          %p241 = pneg %p76
        $region42: #{tpu_custom_call.1} parent=35 // pred_check_branch
          %243 = sbr.rel (%p241) target = $region44
        $region43: #{tpu_custom_call.1} parent=35 // pred_region
          %245 = dma.done [#allocation7], 512
        $region44: #{tpu_custom_call.1} parent=35 // pred_fallthru
          _
        // Predicated region
        $region45: #{tpu_custom_call.1} parent=35 // pred_check
          %p246 = pneg %p97
        $region46: #{tpu_custom_call.1} parent=35 // pred_check_branch
          %248 = sbr.rel (%p246) target = $region48
        $region47: #{tpu_custom_call.1} parent=35 // pred_region
          %250 = dma.done [#allocation7], 16
        $region48: #{tpu_custom_call.1} parent=35 // pred_fallthru
          _
        %s251 = sand.u32 %s42, 1
        %s252 = scalar_lea.sflag [#allocation4], %s251
        %s253 = sand.u32 %s42, 1
        %s254 = smul.addr %s253, 16
        %s255 = scalar_lea.vmem [#allocation3], %s254
        %p256 = pneg %p55
        %p257 = pneg %p52
        %p258 = pneg %p76
        %p259 = pneg %p73
        %p260 = pneg %p97
        %p261 = pneg %p94
        %p262 = scmp.lt.s32.totalorder %s26, 1
        %s263 = scalar_select %p262, %s26, 1
        %s264 = scalar_lea.vmem %s3, %s263
        %p265 = pneg %p123
        %p266 = pneg %p120
        %p267 = pneg %p151
        %p268 = pneg %p148
        %s269 = sand.u32 %s138, 1
        %s270 = scalar_lea.sflag [#allocation5], %s269
        %s271 = sand.u32 %s138, 1
        %s272 = smul.addr %s271, 16
        %s273 = scalar_lea.vmem [#allocation9], %s272
        %p274 = scmp.lt.s32.totalorder %s26, 1
        %s275 = scalar_select %p274, %s26, 1
        %s276 = scalar_lea.vmem %s3, %s275
        %s277 = smul.u32 2, %s27
        %v278 = vld [vmem:[%s235] sm:$0xff]
        %v279 = vld [vmem:[%s235 + $0x8] sm:$0xff]
        %v280 = vld [vmem:[%s276] sm:$0x1]
        %p281 = scmp.eq.s32.totalorder %s27, 0
        // Predicated region
        $region49: #{tpu_custom_call.1} parent=35 // pred_check
          %p282 = pneg %p281
        $region50: #{tpu_custom_call.1} parent=35 // pred_check_branch
          %284 = sbr.rel (%p282) target = $region52
        $region51: #{tpu_custom_call.1} parent=35 // pred_region
          %v285 = vld [vmem:[#allocation6] sm:$0xff]
          %v286 = vld [vmem:[#allocation6 + $0x8] sm:$0xff]
          %v287 = vld [vmem:[#allocation6 + $0x10] sm:$0xff]
          %v288 = vld [vmem:[#allocation6 + $0x18] sm:$0xff]
          %v289 = vld [vmem:[#allocation8] sm:$0x1]
          %v291 = vperm.slane %v289, 0
          %vm293 = vcmask 261120
          %v295 = vsel %vm293, %v278, 0
          %v298 = vsel %vm293, %v279, 0
          %300 = vmatpush.msra.mxu0 0.0
          %301 = vmatpush.msra.mxu0 0.0
          %302 = vmatpush.msra.mxu0 0.0
          %303 = vmatpush.msra.mxu0 0.0
          %304 = vmatpush.msra.mxu0 0.0
          %305 = vmatpush.msra.mxu0 0.0
          %306 = vmatpush.msra.mxu0 0.0
          %307 = vmatpush.msra.mxu0 0.0
          %308 = vmatpush.msra.mxu0 0.0
          %309 = vmatpush.msra.mxu0 0.0
          %310 = vmatpush.msra.mxu0 0.0
          %311 = vmatpush.msra.mxu0 0.0
          %312 = vmatpush.msra.mxu0 %v288
          %313 = vmatpush.msra.mxu0 %v287
          %314 = vmatpush.msra.mxu0 %v286
          %315 = vmatpush.msra.mxu0 %v285
          %316 = vmatmul.f32.gmra.mxu0 %v295
          %v317 = vpop.f32.mrf.mxu0
          %v318 = vadd.f32 %v291, %v317
          %319 = vmatmul.f32.gmra.mxu0 %v298
          %v320 = vpop.f32.mrf.mxu0
          %v321 = vadd.f32 %v291, %v320
          %322 = vdwg.mxu0
          %vm323 = vcmask 785408
          %324 = vst.msk [vmem:[#allocation2] sm:$0xff] %vm323, %v318
          %325 = vst.msk [vmem:[#allocation2 + $0x8] sm:$0xff] %vm323, %v321
        $region52: #{tpu_custom_call.1} parent=35 // pred_fallthru
          _
        %s326 = smul.u32 %s27, 16
        %s327 = scalar_lea.vmem [#allocation2], %s326
        %v328 = vld [vmem:[%s327] sm:$0xff]
        %v329 = vld [vmem:[%s327 + $0x8] sm:$0xff]
        %v330 = vld [vmem:[#allocation2] sm:$0xff]
        %v331 = vld [vmem:[#allocation2 + $0x8] sm:$0xff]
        %v333 = vperm.slane %v280, 0
        %337 = vrot.lane.b32.xlu0 %v330, 96
        %v338 = vpop.permute.xlu0 %337
        %339 = vrot.lane.b32.xlu0 %v331, 96
        %v340 = vpop.permute.xlu0 %339
        %vm341 = vcmask 64512
        %v343 = vsel %vm341, %v328, 0
        %v346 = vsel %vm341, %v329, 0
        %v348 = vsel %vm341, %v338, 0
        %v350 = vsel %vm341, %v340, 0
        %352 = vmatpush.xpose.msra.mxu0 0.0
        %353 = vmatpush.xpose.msra.mxu0 0.0
        %354 = vmatpush.xpose.msra.mxu0 0.0
        %355 = vmatpush.xpose.msra.mxu0 0.0
        %356 = vmatpush.xpose.msra.mxu0 0.0
        %357 = vmatpush.xpose.msra.mxu0 0.0
        %358 = vmatpush.xpose.msra.mxu0 0.0
        %359 = vmatpush.xpose.msra.mxu0 0.0
        %360 = vmatpush.xpose.msra.mxu0 0.0
        %361 = vmatpush.xpose.msra.mxu0 0.0
        %362 = vmatpush.xpose.msra.mxu0 0.0
        %363 = vmatpush.xpose.msra.mxu0 0.0
        %364 = vmatpush.xpose.msra.mxu0 0.0
        %365 = vmatpush.xpose.msra.mxu0 0.0
        %366 = vmatpush.xpose.msra.mxu0 %v350
        %367 = vmatpush.xpose.msra.mxu0 %v348
        %368 = vmatmul.f32.gmra.mxu0 %v343
        %v369 = vpop.f32.mrf.mxu0
        %v370 = vadd.f32 %v333, %v369
        %371 = vmatmul.f32.gmra.mxu0 %v346
        %v372 = vpop.f32.mrf.mxu0
        %v373 = vadd.f32 %v333, %v372
        %374 = vdwg.mxu0
        %vm375 = vcmask 130048
        %v376 = vsel %vm375, %v370, -inf
        %377 = vmax.xlane.f32.xlu0 %v376
        %v378 = vpop.xlane.xlu0 %377
        %v379 = vsel %vm375, %v373, -inf
        %380 = vmax.xlane.f32.xlu0 %v379
        %v381 = vpop.xlane.xlu0 %380
        %v382 = vsub.f32 %v370, %v378
        %v383 = vsub.f32 %v373, %v381
        %v384 = vmul.f32 %v382, 1.442695
        %v385 = vpow.pop %v384
        %v386 = vmul.f32 %v383, 1.442695
        %v387 = vpow.pop %v386
        %v388 = vsel %vm375, %v385, 0.0
        %389 = vadd.xlane.f32.xlu0 %v388
        %v390 = vpop.xlane.xlu0 %389
        %v391 = vsel %vm375, %v387, 0.0
        %392 = vadd.xlane.f32.xlu0 %v391
        %v393 = vpop.xlane.xlu0 %392
        %394 = vrot.lane.b32.xlu0 %v330, 64
        %v395 = vpop.permute.xlu0 %394
        %396 = vrot.lane.b32.xlu0 %v331, 64
        %v397 = vpop.permute.xlu0 %396
        %v401 = vsel %vm375, %v385, 0
        %v404 = vsel %vm375, %v387, 0
        %406 = vmatpush.msra.mxu0 0.0
        %407 = vmatpush.msra.mxu0 0.0
        %408 = vmatpush.msra.mxu0 0.0
        %409 = vmatpush.msra.mxu0 0.0
        %410 = vmatpush.msra.mxu0 0.0
        %411 = vmatpush.msra.mxu0 0.0
        %412 = vmatpush.msra.mxu0 0.0
        %413 = vmatpush.msra.mxu0 0.0
        %414 = vmatpush.msra.mxu0 0.0
        %415 = vmatpush.msra.mxu0 0.0
        %416 = vmatpush.msra.mxu0 0.0
        %417 = vmatpush.msra.mxu0 0.0
        %418 = vmatpush.msra.mxu0 0.0
        %419 = vmatpush.msra.mxu0 0.0
        %420 = vmatpush.msra.mxu0 %v397
        %421 = vmatpush.msra.mxu0 %v395
        %422 = vmatmul.f32.gmra.mxu0 %v401
        %v423 = vpop.f32.mrf.mxu0
        %v424 = vadd.f32 0.0, %v423
        %425 = vmatmul.f32.gmra.mxu0 %v404
        %v426 = vpop.f32.mrf.mxu0
        %v427 = vadd.f32 0.0, %v426
        %428 = vdwg.mxu0
        %v429 = vrcp.pop %v390
        %v430 = vrcp.pop %v393
        %v431 = vmul.f32 %v424, %v429
        %v432 = vmul.f32 %v427, %v430
        %433 = vst.msk [vmem:[%s273] sm:$0xff] %vm341, %v431
        %434 = vst.msk [vmem:[%s273 + $0x8] sm:$0xff] %vm341, %v432
        %v435 = vld [vmem:[%s327] sm:$0xff]
        %v436 = vld [vmem:[%s327 + $0x8] sm:$0xff]
        %v437 = vld [vmem:[#allocation2] sm:$0xff]
        %v438 = vld [vmem:[#allocation2 + $0x8] sm:$0xff]
        %441 = vrot.lane.b32.xlu0 %v435, 120
        %v442 = vpop.permute.xlu0 %441
        %443 = vrot.lane.b32.xlu0 %v436, 120
        %v444 = vpop.permute.xlu0 %443
        %447 = vrot.lane.b32.xlu0 %v437, 88
        %v448 = vpop.permute.xlu0 %447
        %449 = vrot.lane.b32.xlu0 %v438, 88
        %v450 = vpop.permute.xlu0 %449
        %v451 = vsel %vm341, %v442, 0
        %v453 = vsel %vm341, %v444, 0
        %v455 = vsel %vm341, %v448, 0
        %v457 = vsel %vm341, %v450, 0
        %459 = vmatpush.xpose.msra.mxu0 0.0
        %460 = vmatpush.xpose.msra.mxu0 0.0
        %461 = vmatpush.xpose.msra.mxu0 0.0
        %462 = vmatpush.xpose.msra.mxu0 0.0
        %463 = vmatpush.xpose.msra.mxu0 0.0
        %464 = vmatpush.xpose.msra.mxu0 0.0
        %465 = vmatpush.xpose.msra.mxu0 0.0
        %466 = vmatpush.xpose.msra.mxu0 0.0
        %467 = vmatpush.xpose.msra.mxu0 0.0
        %468 = vmatpush.xpose.msra.mxu0 0.0
        %469 = vmatpush.xpose.msra.mxu0 0.0
        %470 = vmatpush.xpose.msra.mxu0 0.0
        %471 = vmatpush.xpose.msra.mxu0 0.0
        %472 = vmatpush.xpose.msra.mxu0 0.0
        %473 = vmatpush.xpose.msra.mxu0 %v457
        %474 = vmatpush.xpose.msra.mxu0 %v455
        %475 = vmatmul.f32.gmra.mxu0 %v451
        %v476 = vpop.f32.mrf.mxu0
        %v477 = vadd.f32 %v333, %v476
        %478 = vmatmul.f32.gmra.mxu0 %v453
        %v479 = vpop.f32.mrf.mxu0
        %v480 = vadd.f32 %v333, %v479
        %481 = vdwg.mxu0
        %v482 = vsel %vm375, %v477, -inf
        %483 = vmax.xlane.f32.xlu0 %v482
        %v484 = vpop.xlane.xlu0 %483
        %v485 = vsel %vm375, %v480, -inf
        %486 = vmax.xlane.f32.xlu0 %v485
        %v487 = vpop.xlane.xlu0 %486
        %v488 = vsub.f32 %v477, %v484
        %v489 = vsub.f32 %v480, %v487
        %v490 = vmul.f32 %v488, 1.442695
        %v491 = vpow.pop %v490
        %v492 = vmul.f32 %v489, 1.442695
        %v493 = vpow.pop %v492
        %v494 = vsel %vm375, %v491, 0.0
        %495 = vadd.xlane.f32.xlu0 %v494
        %v496 = vpop.xlane.xlu0 %495
        %v497 = vsel %vm375, %v493, 0.0
        %498 = vadd.xlane.f32.xlu0 %v497
        %v499 = vpop.xlane.xlu0 %498
        %500 = vrot.lane.b32.xlu0 %v437, 56
        %v501 = vpop.permute.xlu0 %500
        %502 = vrot.lane.b32.xlu0 %v438, 56
        %v503 = vpop.permute.xlu0 %502
        %v507 = vsel %vm375, %v491, 0
        %v510 = vsel %vm375, %v493, 0
        %512 = vmatpush.msra.mxu0 0.0
        %513 = vmatpush.msra.mxu0 0.0
        %514 = vmatpush.msra.mxu0 0.0
        %515 = vmatpush.msra.mxu0 0.0
        %516 = vmatpush.msra.mxu0 0.0
        %517 = vmatpush.msra.mxu0 0.0
        %518 = vmatpush.msra.mxu0 0.0
        %519 = vmatpush.msra.mxu0 0.0
        %520 = vmatpush.msra.mxu0 0.0
        %521 = vmatpush.msra.mxu0 0.0
        %522 = vmatpush.msra.mxu0 0.0
        %523 = vmatpush.msra.mxu0 0.0
        %524 = vmatpush.msra.mxu0 0.0
        %525 = vmatpush.msra.mxu0 0.0
        %526 = vmatpush.msra.mxu0 %v503
        %527 = vmatpush.msra.mxu0 %v501
        %528 = vmatmul.f32.gmra.mxu0 %v507
        %v529 = vpop.f32.mrf.mxu0
        %v530 = vadd.f32 0.0, %v529
        %531 = vmatmul.f32.gmra.mxu0 %v510
        %v532 = vpop.f32.mrf.mxu0
        %v533 = vadd.f32 0.0, %v532
        %534 = vdwg.mxu0
        %v535 = vrcp.pop %v496
        %v536 = vrcp.pop %v499
        %v537 = vmul.f32 %v530, %v535
        %v538 = vmul.f32 %v533, %v536
        %541 = vrot.lane.b32.xlu0 %v537, 8
        %v542 = vpop.permute.xlu0 %541
        %543 = vrot.lane.b32.xlu0 %v538, 8
        %v544 = vpop.permute.xlu0 %543
        %vm547 = vcmask 130112
        %548 = vst.msk [vmem:[%s273] sm:$0xff] %vm547, %v542
        %549 = vst.msk [vmem:[%s273 + $0x8] sm:$0xff] %vm547, %v544
        %v550 = vld [vmem:[%s327] sm:$0xff]
        %v551 = vld [vmem:[%s327 + $0x8] sm:$0xff]
        %v552 = vld [vmem:[#allocation2] sm:$0xff]
        %v553 = vld [vmem:[#allocation2 + $0x8] sm:$0xff]
        %556 = vrot.lane.b32.xlu0 %v550, 112
        %v557 = vpop.permute.xlu0 %556
        %558 = vrot.lane.b32.xlu0 %v551, 112
        %v559 = vpop.permute.xlu0 %558
        %562 = vrot.lane.b32.xlu0 %v552, 80
        %v563 = vpop.permute.xlu0 %562
        %564 = vrot.lane.b32.xlu0 %v553, 80
        %v565 = vpop.permute.xlu0 %564
        %v566 = vsel %vm341, %v557, 0
        %v568 = vsel %vm341, %v559, 0
        %v570 = vsel %vm341, %v563, 0
        %v572 = vsel %vm341, %v565, 0
        %574 = vmatpush.xpose.msra.mxu0 0.0
        %575 = vmatpush.xpose.msra.mxu0 0.0
        %576 = vmatpush.xpose.msra.mxu0 0.0
        %577 = vmatpush.xpose.msra.mxu0 0.0
        %578 = vmatpush.xpose.msra.mxu0 0.0
        %579 = vmatpush.xpose.msra.mxu0 0.0
        %580 = vmatpush.xpose.msra.mxu0 0.0
        %581 = vmatpush.xpose.msra.mxu0 0.0
        %582 = vmatpush.xpose.msra.mxu0 0.0
        %583 = vmatpush.xpose.msra.mxu0 0.0
        %584 = vmatpush.xpose.msra.mxu0 0.0
        %585 = vmatpush.xpose.msra.mxu0 0.0
        %586 = vmatpush.xpose.msra.mxu0 0.0
        %587 = vmatpush.xpose.msra.mxu0 0.0
        %588 = vmatpush.xpose.msra.mxu0 %v572
        %589 = vmatpush.xpose.msra.mxu0 %v570
        %590 = vmatmul.f32.gmra.mxu0 %v566
        %v591 = vpop.f32.mrf.mxu0
        %v592 = vadd.f32 %v333, %v591
        %593 = vmatmul.f32.gmra.mxu0 %v568
        %v594 = vpop.f32.mrf.mxu0
        %v595 = vadd.f32 %v333, %v594
        %596 = vdwg.mxu0
        %v597 = vsel %vm375, %v592, -inf
        %598 = vmax.xlane.f32.xlu0 %v597
        %v599 = vpop.xlane.xlu0 %598
        %v600 = vsel %vm375, %v595, -inf
        %601 = vmax.xlane.f32.xlu0 %v600
        %v602 = vpop.xlane.xlu0 %601
        %v603 = vsub.f32 %v592, %v599
        %v604 = vsub.f32 %v595, %v602
        %v605 = vmul.f32 %v603, 1.442695
        %v606 = vpow.pop %v605
        %v607 = vmul.f32 %v604, 1.442695
        %v608 = vpow.pop %v607
        %v609 = vsel %vm375, %v606, 0.0
        %610 = vadd.xlane.f32.xlu0 %v609
        %v611 = vpop.xlane.xlu0 %610
        %v612 = vsel %vm375, %v608, 0.0
        %613 = vadd.xlane.f32.xlu0 %v612
        %v614 = vpop.xlane.xlu0 %613
        %615 = vrot.lane.b32.xlu0 %v552, 48
        %v616 = vpop.permute.xlu0 %615
        %617 = vrot.lane.b32.xlu0 %v553, 48
        %v618 = vpop.permute.xlu0 %617
        %v622 = vsel %vm375, %v606, 0
        %v625 = vsel %vm375, %v608, 0
        %627 = vmatpush.msra.mxu0 0.0
        %628 = vmatpush.msra.mxu0 0.0
        %629 = vmatpush.msra.mxu0 0.0
        %630 = vmatpush.msra.mxu0 0.0
        %631 = vmatpush.msra.mxu0 0.0
        %632 = vmatpush.msra.mxu0 0.0
        %633 = vmatpush.msra.mxu0 0.0
        %634 = vmatpush.msra.mxu0 0.0
        %635 = vmatpush.msra.mxu0 0.0
        %636 = vmatpush.msra.mxu0 0.0
        %637 = vmatpush.msra.mxu0 0.0
        %638 = vmatpush.msra.mxu0 0.0
        %639 = vmatpush.msra.mxu0 0.0
        %640 = vmatpush.msra.mxu0 0.0
        %641 = vmatpush.msra.mxu0 %v618
        %642 = vmatpush.msra.mxu0 %v616
        %643 = vmatmul.f32.gmra.mxu0 %v622
        %v644 = vpop.f32.mrf.mxu0
        %v645 = vadd.f32 0.0, %v644
        %646 = vmatmul.f32.gmra.mxu0 %v625
        %v647 = vpop.f32.mrf.mxu0
        %v648 = vadd.f32 0.0, %v647
        %649 = vdwg.mxu0
        %v650 = vrcp.pop %v611
        %v651 = vrcp.pop %v614
        %v652 = vmul.f32 %v645, %v650
        %v653 = vmul.f32 %v648, %v651
        %656 = vrot.lane.b32.xlu0 %v652, 16
        %v657 = vpop.permute.xlu0 %656
        %658 = vrot.lane.b32.xlu0 %v653, 16
        %v659 = vpop.permute.xlu0 %658
        %vm662 = vcmask 195712
        %663 = vst.msk [vmem:[%s273] sm:$0xff] %vm662, %v657
        %664 = vst.msk [vmem:[%s273 + $0x8] sm:$0xff] %vm662, %v659
        %v665 = vld [vmem:[%s327] sm:$0xff]
        %v666 = vld [vmem:[%s327 + $0x8] sm:$0xff]
        %v667 = vld [vmem:[#allocation2] sm:$0xff]
        %v668 = vld [vmem:[#allocation2 + $0x8] sm:$0xff]
        %671 = vrot.lane.b32.xlu0 %v665, 104
        %v672 = vpop.permute.xlu0 %671
        %673 = vrot.lane.b32.xlu0 %v666, 104
        %v674 = vpop.permute.xlu0 %673
        %677 = vrot.lane.b32.xlu0 %v667, 72
        %v678 = vpop.permute.xlu0 %677
        %679 = vrot.lane.b32.xlu0 %v668, 72
        %v680 = vpop.permute.xlu0 %679
        %v681 = vsel %vm341, %v672, 0
        %v683 = vsel %vm341, %v674, 0
        %v685 = vsel %vm341, %v678, 0
        %v687 = vsel %vm341, %v680, 0
        %689 = vmatpush.xpose.msra.mxu0 0.0
        %690 = vmatpush.xpose.msra.mxu0 0.0
        %691 = vmatpush.xpose.msra.mxu0 0.0
        %692 = vmatpush.xpose.msra.mxu0 0.0
        %693 = vmatpush.xpose.msra.mxu0 0.0
        %694 = vmatpush.xpose.msra.mxu0 0.0
        %695 = vmatpush.xpose.msra.mxu0 0.0
        %696 = vmatpush.xpose.msra.mxu0 0.0
        %697 = vmatpush.xpose.msra.mxu0 0.0
        %698 = vmatpush.xpose.msra.mxu0 0.0
        %699 = vmatpush.xpose.msra.mxu0 0.0
        %700 = vmatpush.xpose.msra.mxu0 0.0
        %701 = vmatpush.xpose.msra.mxu0 0.0
        %702 = vmatpush.xpose.msra.mxu0 0.0
        %703 = vmatpush.xpose.msra.mxu0 %v687
        %704 = vmatpush.xpose.msra.mxu0 %v685
        %705 = vmatmul.f32.gmra.mxu0 %v681
        %v706 = vpop.f32.mrf.mxu0
        %v707 = vadd.f32 %v333, %v706
        %708 = vmatmul.f32.gmra.mxu0 %v683
        %v709 = vpop.f32.mrf.mxu0
        %v710 = vadd.f32 %v333, %v709
        %711 = vdwg.mxu0
        %v712 = vsel %vm375, %v707, -inf
        %713 = vmax.xlane.f32.xlu0 %v712
        %v714 = vpop.xlane.xlu0 %713
        %v715 = vsel %vm375, %v710, -inf
        %716 = vmax.xlane.f32.xlu0 %v715
        %v717 = vpop.xlane.xlu0 %716
        %v718 = vsub.f32 %v707, %v714
        %v719 = vsub.f32 %v710, %v717
        %v720 = vmul.f32 %v718, 1.442695
        %v721 = vpow.pop %v720
        %v722 = vmul.f32 %v719, 1.442695
        %v723 = vpow.pop %v722
        %v724 = vsel %vm375, %v721, 0.0
        %725 = vadd.xlane.f32.xlu0 %v724
        %v726 = vpop.xlane.xlu0 %725
        %v727 = vsel %vm375, %v723, 0.0
        %728 = vadd.xlane.f32.xlu0 %v727
        %v729 = vpop.xlane.xlu0 %728
        %730 = vrot.lane.b32.xlu0 %v667, 40
        %v731 = vpop.permute.xlu0 %730
        %732 = vrot.lane.b32.xlu0 %v668, 40
        %v733 = vpop.permute.xlu0 %732
        %v737 = vsel %vm375, %v721, 0
        %v740 = vsel %vm375, %v723, 0
        %742 = vmatpush.msra.mxu0 0.0
        %743 = vmatpush.msra.mxu0 0.0
        %744 = vmatpush.msra.mxu0 0.0
        %745 = vmatpush.msra.mxu0 0.0
        %746 = vmatpush.msra.mxu0 0.0
        %747 = vmatpush.msra.mxu0 0.0
        %748 = vmatpush.msra.mxu0 0.0
        %749 = vmatpush.msra.mxu0 0.0
        %750 = vmatpush.msra.mxu0 0.0
        %751 = vmatpush.msra.mxu0 0.0
        %752 = vmatpush.msra.mxu0 0.0
        %753 = vmatpush.msra.mxu0 0.0
        %754 = vmatpush.msra.mxu0 0.0
        %755 = vmatpush.msra.mxu0 0.0
        %756 = vmatpush.msra.mxu0 %v733
        %757 = vmatpush.msra.mxu0 %v731
        %758 = vmatmul.f32.gmra.mxu0 %v737
        %v759 = vpop.f32.mrf.mxu0
        %v760 = vadd.f32 0.0, %v759
        %761 = vmatmul.f32.gmra.mxu0 %v740
        %v762 = vpop.f32.mrf.mxu0
        %v763 = vadd.f32 0.0, %v762
        %764 = vdwg.mxu0
        %v765 = vrcp.pop %v726
        %v766 = vrcp.pop %v729
        %v767 = vmul.f32 %v760, %v765
        %v768 = vmul.f32 %v763, %v766
        %771 = vrot.lane.b32.xlu0 %v767, 24
        %v772 = vpop.permute.xlu0 %771
        %773 = vrot.lane.b32.xlu0 %v768, 24
        %v774 = vpop.permute.xlu0 %773
        %vm777 = vcmask 261312
        %778 = vst.msk [vmem:[%s273] sm:$0xff] %vm777, %v772
        %779 = vst.msk [vmem:[%s273 + $0x8] sm:$0xff] %vm777, %v774
        %s780 = sand.u32 %s138, 1
        %s781 = scalar_lea.sflag [#allocation5], %s780
        %s782 = sand.u32 %s138, 1
        %s783 = smul.addr %s782, 16
        %s784 = scalar_lea.vmem [#allocation9], %s783
        // Predicated region
        $region53: #{tpu_custom_call.1} parent=35 // pred_check
          %p785 = pneg %p148
        $region54: #{tpu_custom_call.1} parent=35 // pred_check_branch
          %787 = sbr.rel (%p785) target = $region56
        $region55: #{tpu_custom_call.1} parent=35 // pred_region
          %s788 = smul.u32 2, %s27
          %790 = vsyncadd %s781, 0
          %s791 = smul.addr %s26, 2
          %s792 = sadd.s32 %s788, %s791
          %s793 = smul.addr %s792, 8
          %s794 = scalar_lea.hbm %s4, %s793
          %s795 = sshll.u32 %s784, 4
          %s796 = int_to_ptr.vmem [resolvable:$true] %s795
          %s797 = sshll.u32 %s794, 4
          %s798 = int_to_ptr.hbm [resolvable:$true] %s797
          %803 = dma.vmem_to_hbm [thread:$0]  %s796, 256, %s798, %s781, 128, 128, 8
        $region56: #{tpu_custom_call.1} parent=35 // pred_fallthru
          _
      $region36: #{tpu_custom_call.1} parent=5 // pred_fallthru
        _
      %p804 = scmp.le.s32.totalorder 2, %s17
      // Predicated region
      $region57: #{tpu_custom_call.1} parent=5 // pred_check
        %p805 = pneg %p804
      $region58: #{tpu_custom_call.1} parent=5 // pred_check_branch
        %807 = sbr.rel (%p805) target = $region60
      $region59: #{tpu_custom_call.1} parent=5 // pred_region
        %s808 = ssub.s32 %s17, 2
        // Predicated region
        $region61: #{tpu_custom_call.1} parent=59 // pred_check
          %p809 = pneg %p154
        $region62: #{tpu_custom_call.1} parent=59 // pred_check_branch
          %811 = sbr.rel (%p809) target = $region64
        $region63: #{tpu_custom_call.1} parent=59 // pred_region
          %s812 = sand.u32 %s139, 1
          %s813 = scalar_lea.sflag [#allocation5], %s812
          %s814 = sand.u32 %s139, 1
          %s815 = smul.addr %s814, 16
          %s816 = scalar_lea.vmem [#allocation9], %s815
          %818 = dma.done %s813, 256
        $region64: #{tpu_custom_call.1} parent=59 // pred_fallthru
          _
      $region60: #{tpu_custom_call.1} parent=5 // pred_fallthru
        _
    $region6: #{tpu_custom_call.1} parent=1 // loop_footer
      %s21 = sadd.s32 1, %s17
    $region7: #{tpu_custom_call.1} parent=1 // loop_footer_branch
      %16 = sbr.rel target = $region3
    $region8: #{tpu_custom_call.1} parent=1 // loop_exit
      _
    %819 = vsyncpa [#allocation4], 1
    %s820 = scalar_lea.sflag [#allocation4], 1
    %821 = vsyncpa %s820, 1
    %822 = vsyncpa [#allocation7], 1
    %823 = vsyncpa [#allocation5], 1
    %s824 = scalar_lea.sflag [#allocation5], 1
    %825 = vsyncpa %s824, 1

</llo_original>
